<compile_context>
chip_gen: v7x
topology: tpu7x:2x2x1
jax: 0.10.0
libtpu: 0.0.40
codegen_flags: <defaults>
</compile_context>

<pallas_src>
import functools

import jax
import jax.numpy as jnp
from jax.experimental import pallas as pl
from jax.experimental.pallas import tpu as pltpu


# ----------------------------------------------------------------------------
# Kernel
# ----------------------------------------------------------------------------
def deepfm_kernel(packed_ref, wlin_ref, s_ref, w1p_ref, b1_ref, w2_ref,
                  b2_ref, w3_ref, bias_ref, out_ref, *, FE):
    packed = packed_ref[...]                       # (T, P) bf16, lane-dense
    pk32 = packed.astype(jnp.float32)              # one VPU upcast of the block
    emb32 = pk32[:, :FE]                           # (T, F*E) f32
    genre32 = pk32[:, FE:FE + 18]                  # (T, 18)  f32
    fc_sum = pk32[:, FE + 18:FE + 19]              # (T, 1)   f32

    # ---------------- FM part (f32 accumulation) ----------------
    eg = jnp.dot(genre32.astype(jnp.bfloat16), wlin_ref[...],
                 preferred_element_type=jnp.float32)                 # (T, E)
    # sum over fields per embedding lane, done on the MXU (S = stacked identity)
    sum_in = jnp.dot(emb32.astype(jnp.bfloat16), s_ref[...],
                     preferred_element_type=jnp.float32) + eg        # (T, E)
    # sum_e sum_f x_{f,e}^2  ==  sum over all embed lanes of x^2 + sum_e eg^2
    sq_tot = (jnp.sum(emb32 * emb32, axis=1, keepdims=True)
              + jnp.sum(eg * eg, axis=1, keepdims=True))
    fm_y = (bias_ref[0, 0] + fc_sum
            + jnp.sum(eg, axis=1, keepdims=True)
            + 0.5 * (jnp.sum(sum_in * sum_in, axis=1, keepdims=True) - sq_tot))

    # ---------------- MLP part (bf16 MXU, f32 accumulation) ----------------
    # First layer: one matmul against the packed block; W1p already contains
    # W1_embed rows, (w_lin @ W1_genre) rows for the genre columns, and zero
    # rows for the fc_sum / lane-padding columns.
    h = jnp.dot(packed, w1p_ref[...],
                preferred_element_type=jnp.float32) + b1_ref[...]
    h = jnp.maximum(h, 0.0)
    h = jnp.dot(h.astype(jnp.bfloat16), w2_ref[...],
                preferred_element_type=jnp.float32) + b2_ref[...]
    h = jnp.maximum(h, 0.0)
    # final (hidden2 -> 1) layer as a VPU reduction; its bias b3 is folded into
    # bias_ref.
    mlp_y = jnp.sum(h * w3_ref[...], axis=1, keepdims=True)          # (T, 1)

    out_ref[...] = jax.nn.sigmoid(fm_y + mlp_y)


# ----------------------------------------------------------------------------
# Tiling / budget helpers
# ----------------------------------------------------------------------------
def _vmem_budget_bytes():
    """Generation-aware VMEM budget (3/4 of physical; fallback = v7x 64 MiB)."""
    cap = None
    try:
        cap = getattr(pltpu.get_tpu_info(), "vmem_capacity_bytes", None)
    except Exception:
        cap = None
    if not cap or cap <= 0:
        cap = 64 * 1024 * 1024
    return int(cap) * 3 // 4        # ~48 MiB on v7x, ~96 MiB on v5e/v6e


def _pick_tile_b(B, FE, P, E, mlp0, mlp1, budget_bytes):
    """Largest batch tile that fits the budget (multiple of 256 when large,
    16 minimum for bf16 sublane packing)."""
    # Resident weight blocks (double-buffered by default -> x2).
    # TODO(synk): single-buffer them via pipeline_mode=pl.Buffered(1).
    resident = 2 * (2 * (18 * E + FE * E + P * mlp0 + mlp0 * mlp1)
                    + 4 * (mlp0 + 2 * mlp1 + 1))
    # Per-row: double-buffered bf16 input + f32 output blocks, plus an
    # allowance for in-kernel f32 temporaries (upcast block, FM sums, MLP acts).
    per_row = (2 * 2 * P + 2 * 4
               + 4 * (P + 3 * E + 2 * mlp0 + 2 * mlp1))
    tile = (budget_bytes - resident) // max(per_row, 1)
    tile = max(16, min(int(tile), 8192))
    tile = (tile // 256) * 256 if tile >= 256 else (tile // 16) * 16
    b_pad = -(-B // 16) * 16
    return max(16, min(tile, b_pad))


# ----------------------------------------------------------------------------
# Wrapper
# ----------------------------------------------------------------------------
def deepfm_forward(x, params, num_fields, embedding_dim, tile_b=None):
    """x: int32 (B, num_fields + 18). Returns f32 (B,)."""
    B = x.shape[0]
    F, E = num_fields, embedding_dim
    FE = F * E
    mlp0 = params["w1"].shape[1]
    mlp1 = params["w2"].shape[1]
    P = -(-(FE + 19) // 128) * 128                         # packed lane width

    budget = _vmem_budget_bytes()
    TILE_B = tile_b if tile_b is not None else _pick_tile_b(
        B, FE, P, E, mlp0, mlp1, budget)
    assert TILE_B % 16 == 0, "TILE_B must be a multiple of 16 (bf16 sublanes)"
    n_tiles = -(-B // TILE_B)
    B_pad = n_tiles * TILE_B
    pad = B_pad - B

    # Pad the cheap int32 input (not the gathered tensors).
    xp = jnp.pad(x, ((0, pad), (0, 0))) if pad else x
    x_cat = xp[:, :F]                                      # (B_pad, F) indices
    genre = xp[:, F:F + 18].astype(jnp.bfloat16)           # (B_pad, 18)

    # Wrapper-side gathers producing bf16 directly (halves the HBM round trip).
    # TODO(synk): in-kernel gather via scalar-prefetch indices + manual DMA from
    # an HBM-resident embedding table to remove the round trip entirely.
    emb_tbl = params["embedding"].astype(jnp.bfloat16)
    embed_flat = jnp.take(emb_tbl, x_cat, axis=0).reshape(B_pad, FE)
    fc_sum = jnp.sum(jnp.take(params["fc"], x_cat, axis=0)[..., 0],
                     axis=1, keepdims=True).astype(jnp.bfloat16)

    # Single lane-dense packed stream: [embed | genre | fc_sum | zero pad].
    packed = jnp.concatenate(
        [embed_flat, genre, fc_sum,
         jnp.zeros((B_pad, P - FE - 19), jnp.bfloat16)], axis=1)

    # ---- resident weights ----
    w_lin = params["w_lin"].astype(jnp.bfloat16)                        # (18, E)
    S = jnp.tile(jnp.eye(E, dtype=jnp.float32), (F, 1)).astype(jnp.bfloat16)
    wg = params["w_lin"] @ params["w1"][FE:FE + E]                      # (18, mlp0)
    w1p = jnp.concatenate(
        [params["w1"][:FE], wg,
         jnp.zeros((P - FE - 18, mlp0), jnp.float32)], axis=0).astype(jnp.bfloat16)
    b1 = params["b1"].astype(jnp.float32)                               # (1, mlp0)
    w2 = params["w2"].astype(jnp.bfloat16)                              # (mlp0, mlp1)
    b2 = params["b2"].astype(jnp.float32)                               # (1, mlp1)
    w3_row = params["w3"].T.astype(jnp.float32)                         # (1, mlp1)
    bias_total = (params["bias"] + params["b3"]).astype(jnp.float32)    # (1, 1)

    row_block = pl.BlockSpec((TILE_B, P), lambda i: (i, 0))
    resident = lambda shape: pl.BlockSpec(shape, lambda i: (0, 0))
    smem_scalar = pl.BlockSpec((1, 1), lambda i: (0, 0),
                               memory_space=pltpu.MemorySpace.SMEM)

    in_specs = [
        row_block,                      # packed stream
        resident((18, E)),              # w_lin
        resident((FE, E)),              # S (stacked identity)
        resident((P, mlp0)),            # packed first-layer weight
        resident((1, mlp0)),            # b1
        resident((mlp0, mlp1)),         # w2
        resident((1, mlp1)),            # b2
        resident((1, mlp1)),            # w3 row
        smem_scalar,                    # bias + b3
    ]

    flops_per_row = 2 * (18 * E + FE * E + P * mlp0 + mlp0 * mlp1 + mlp1)
    weight_bytes = (2 * (18 * E + FE * E + P * mlp0 + mlp0 * mlp1)
                    + 4 * (mlp0 + 2 * mlp1 + 1))
    cost = pl.CostEstimate(
        flops=int(B_pad * flops_per_row),
        transcendentals=int(B_pad),
        bytes_accessed=int(2 * B_pad * P + 4 * B_pad + weight_bytes),
    )

    kernel = functools.partial(deepfm_kernel, FE=FE)
    out = pl.pallas_call(
        kernel,
        out_shape=jax.ShapeDtypeStruct((B_pad, 1), jnp.float32),
        grid=(n_tiles,),
        in_specs=in_specs,
        out_specs=pl.BlockSpec((TILE_B, 1), lambda i: (i, 0)),
        compiler_params=pltpu.CompilerParams(
            dimension_semantics=("parallel",),
            vmem_limit_bytes=int(budget),
        ),
        cost_estimate=cost,
    )(packed, w_lin, S, w1p, b1, w2, b2, w3_row, bias_total)
    return out[:B, 0]


# ----------------------------------------------------------------------------
# References
# ----------------------------------------------------------------------------
def deepfm_reference(x, params):
    """Pure-JAX f32 reference mirroring the PyTorch forward (eval mode)."""
    x_cat = x[:, :-18]
    genre = x[:, -18:].astype(jnp.float32)
    embed_x = jnp.take(params["embedding"], x_cat, axis=0)          # (B, F, E)
    eg = genre @ params["w_lin"]                                    # (B, E)
    fc_vals = jnp.take(params["fc"], x_cat, axis=0)[..., 0]         # (B, F)

    inp = jnp.concatenate([embed_x, eg[:, None, :]], axis=1)        # (B, F+1, E)
    fm_y = (params["bias"][0, 0]
            + jnp.sum(fc_vals, axis=1, keepdims=True)
            + jnp.sum(eg, axis=1, keepdims=True))
    sq_of_sum = jnp.sum(inp, axis=1) ** 2
    sum_of_sq = jnp.sum(inp ** 2, axis=1)
    fm_y = fm_y + 0.5 * jnp.sum(sq_of_sum - sum_of_sq, axis=1, keepdims=True)

    B = x.shape[0]
    mlp_in = inp.reshape(B, -1)
    h = jnp.maximum(mlp_in @ params["w1"] + params["b1"], 0.0)
    h = jnp.maximum(h @ params["w2"] + params["b2"], 0.0)
    mlp_y = h @ params["w3"] + params["b3"]
    return jax.nn.sigmoid(fm_y[:, 0] + mlp_y[:, 0])


def deepfm_matched_reference(x, params, num_fields, embedding_dim):
    """Plain-JAX replica of the kernel's exact quantization (bf16 streamed
    inputs / bf16 matmul weights, f32 accumulation) for a tight check."""
    B = x.shape[0]
    F, E = num_fields, embedding_dim
    FE = F * E
    f32 = lambda a: a.astype(jnp.float32)
    q = lambda a: f32(a.astype(jnp.bfloat16))

    x_cat = x[:, :F]
    genre = f32(x[:, F:].astype(jnp.bfloat16))
    emb = f32(jnp.take(params["embedding"].astype(jnp.bfloat16),
                       x_cat, axis=0).reshape(B, FE))
    fc_sum = q(jnp.sum(jnp.take(params["fc"], x_cat, axis=0)[..., 0],
                       axis=1, keepdims=True))

    eg = genre @ q(params["w_lin"])
    S = jnp.tile(jnp.eye(E, dtype=jnp.float32), (F, 1))
    sum_in = emb @ S + eg
    sq_tot = (jnp.sum(emb * emb, axis=1, keepdims=True)
              + jnp.sum(eg * eg, axis=1, keepdims=True))
    fm_y = (params["bias"] + fc_sum + jnp.sum(eg, axis=1, keepdims=True)
            + 0.5 * (jnp.sum(sum_in * sum_in, axis=1, keepdims=True) - sq_tot))

    w1a = q(params["w1"][:FE])
    wg = q(params["w_lin"] @ params["w1"][FE:])
    h = jnp.maximum(emb @ w1a + genre @ wg + params["b1"], 0.0)
    h = jnp.maximum(q(h) @ q(params["w2"]) + params["b2"], 0.0)
    mlp_y = jnp.sum(h * params["w3"].T, axis=1, keepdims=True) + params["b3"]
    return jax.nn.sigmoid(fm_y[:, 0] + mlp_y[:, 0])


# ----------------------------------------------------------------------------
# Params / demo
# ----------------------------------------------------------------------------
def make_params(key, input_dims, embedding_dim, mlp_dims):
    total = int(sum(input_dims))
    F = len(input_dims)
    d_mlp_in = (F + 1) * embedding_dim
    ks = jax.random.split(key, 10)

    def init(k, shape, fan_in):
        return jax.random.normal(k, shape, jnp.float32) / jnp.sqrt(float(fan_in))

    return {
        "bias": jnp.zeros((1, 1), jnp.float32),
        "fc": init(ks[0], (total, 1), 4.0),
        "embedding": init(ks[1], (total, embedding_dim), embedding_dim),
        "w_lin": init(ks[2], (18, embedding_dim), 18),
        "w1": init(ks[3], (d_mlp_in, mlp_dims[0]), d_mlp_in),
        "b1": init(ks[4], (1, mlp_dims[0]), d_mlp_in),
        "w2": init(ks[5], (mlp_dims[0], mlp_dims[1]), mlp_dims[0]),
        "b2": init(ks[6], (1, mlp_dims[1]), mlp_dims[0]),
        "w3": init(ks[7], (mlp_dims[1], 1), mlp_dims[1]),
        "b3": init(ks[8], (1, 1), mlp_dims[1]),
    }


if __name__ == "__main__":
    # Small, forward-consistent config.
    input_dims = [10, 20, 30]      # 3 categorical fields, total vocab 60
    embedding_dim = 16
    mlp_dims = [32, 16]
    B = 40
    F = len(input_dims)
    total = int(sum(input_dims))

    key = jax.random.PRNGKey(0)
    k_param, k_cat, k_gen = jax.random.split(key, 3)
    params = make_params(k_param, input_dims, embedding_dim, mlp_dims)

    # Input x: (B, F + 18) int32; first F cols index the shared embedding
    # table, last 18 cols are a 0/1 multi-hot genre vector.
    x_cat = jax.random.randint(k_cat, (B, F), 0, total, dtype=jnp.int32)
    x_genre = jax.random.randint(k_gen, (B, 18), 0, 2, dtype=jnp.int32)
    x = jnp.concatenate([x_cat, x_genre], axis=1)

    y_ref = deepfm_reference(x, params)
    y_match = deepfm_matched_reference(x, params, F, embedding_dim)

    # multi-tile path (grid of 3 with batch padding 40 -> 48)
    y_tiled = jax.block_until_ready(
        deepfm_forward(x, params, F, embedding_dim, tile_b=16))
    assert y_tiled.shape == (B,)

    # auto tile-size path (single 48-row tile here)
    y_auto = jax.block_until_ready(deepfm_forward(x, params, F, embedding_dim))

    # Tight check against the quantization-matched reference (catches real
    # kernel regressions), loose check against the pure-f32 reference (bounds
    # the bf16 streaming / bf16-weight error), and tiling-invariance check.
    assert jnp.allclose(y_tiled, y_match, atol=2e-3, rtol=0), (y_tiled, y_match)
    assert jnp.allclose(y_auto, y_match, atol=2e-3, rtol=0), (y_auto, y_match)
    assert jnp.allclose(y_tiled, y_ref, atol=2e-2, rtol=0), (y_tiled, y_ref)
    assert jnp.allclose(y_auto, y_ref, atol=2e-2, rtol=0), (y_auto, y_ref)
    assert jnp.allclose(y_tiled, y_auto, atol=1e-5, rtol=0), (y_tiled, y_auto)

    print("KERNEL_OK")
</pallas_src>

<mosaic_0001>
module attributes {stable_mosaic.version = 11 : i64} {
  func.func @deepfm_kernel(%arg0: i32, %arg1: memref<16x128xbf16, #tpu.memory_space<vmem>>, %arg2: memref<18x16xbf16, #tpu.memory_space<vmem>>, %arg3: memref<48x16xbf16, #tpu.memory_space<vmem>>, %arg4: memref<128x32xbf16, #tpu.memory_space<vmem>>, %arg5: memref<1x32xf32, #tpu.memory_space<vmem>>, %arg6: memref<32x16xbf16, #tpu.memory_space<vmem>>, %arg7: memref<1x16xf32, #tpu.memory_space<vmem>>, %arg8: memref<1x16xf32, #tpu.memory_space<vmem>>, %arg9: memref<1x1xf32, #tpu.memory_space<smem>>, %arg10: memref<16x1xf32, #tpu.memory_space<vmem>>) attributes {dimension_semantics = [#tpu.dimension_semantics<parallel>], iteration_bounds = array<i64: 3>, scalar_prefetch = 0 : i64, scratch_operands = 0 : i64, tpu.core_type = #tpu.core_type<tc>, window_params = [{transform_indices = @transform_0, window_bounds = array<i64: 16, 128>}, {pipeline_mode = #tpu.pipeline_mode<synchronous>, transform_indices = @transform_1, window_bounds = array<i64: 18, 16>}, {pipeline_mode = #tpu.pipeline_mode<synchronous>, transform_indices = @transform_2, window_bounds = array<i64: 48, 16>}, {pipeline_mode = #tpu.pipeline_mode<synchronous>, transform_indices = @transform_3, window_bounds = array<i64: 128, 32>}, {pipeline_mode = #tpu.pipeline_mode<synchronous>, transform_indices = @transform_4, window_bounds = array<i64: 1, 32>}, {pipeline_mode = #tpu.pipeline_mode<synchronous>, transform_indices = @transform_5, window_bounds = array<i64: 32, 16>}, {pipeline_mode = #tpu.pipeline_mode<synchronous>, transform_indices = @transform_6, window_bounds = array<i64: 1, 16>}, {pipeline_mode = #tpu.pipeline_mode<synchronous>, transform_indices = @transform_7, window_bounds = array<i64: 1, 16>}, {transform_indices = @transform_8, window_bounds = array<i64: 1, 1>}, {transform_indices = @transform_9, window_bounds = array<i64: 16, 1>}]} {
    %c0 = arith.constant 0 : index
    %c0_0 = arith.constant 0 : index
    %0 = vector.load %arg1[%c0, %c0_0] : memref<16x128xbf16, #tpu.memory_space<vmem>>, vector<16x128xbf16>
    %1 = arith.extf %0 : vector<16x128xbf16> to vector<16x128xf32>
    %2 = vector.extract_strided_slice %1 {offsets = [0, 0], sizes = [16, 48], strides = [1, 1]} : vector<16x128xf32> to vector<16x48xf32>
    %3 = vector.extract_strided_slice %1 {offsets = [0, 48], sizes = [16, 18], strides = [1, 1]} : vector<16x128xf32> to vector<16x18xf32>
    %4 = vector.extract_strided_slice %1 {offsets = [0, 66], sizes = [16, 1], strides = [1, 1]} : vector<16x128xf32> to vector<16x1xf32>
    %5 = arith.truncf %3 : vector<16x18xf32> to vector<16x18xbf16>
    %c0_1 = arith.constant 0 : index
    %c0_2 = arith.constant 0 : index
    %6 = vector.load %arg2[%c0_1, %c0_2] : memref<18x16xbf16, #tpu.memory_space<vmem>>, vector<18x16xbf16>
    %cst = arith.constant dense<0.000000e+00> : vector<16x16xf32>
    %7 = tpu.matmul %5, %6, %cst {dimension_numbers = #tpu.dot_dimension_numbers<[1], [0], [0], [1], [0, 0, 1, 1], [], []>} : vector<16x18xbf16>, vector<18x16xbf16>, vector<16x16xf32> -> vector<16x16xf32>
    %8 = arith.truncf %2 : vector<16x48xf32> to vector<16x48xbf16>
    %c0_3 = arith.constant 0 : index
    %c0_4 = arith.constant 0 : index
    %9 = vector.load %arg3[%c0_3, %c0_4] : memref<48x16xbf16, #tpu.memory_space<vmem>>, vector<48x16xbf16>
    %cst_5 = arith.constant dense<0.000000e+00> : vector<16x16xf32>
    %10 = tpu.matmul %8, %9, %cst_5 {dimension_numbers = #tpu.dot_dimension_numbers<[1], [0], [0], [1], [0, 0, 1, 1], [], []>} : vector<16x48xbf16>, vector<48x16xbf16>, vector<16x16xf32> -> vector<16x16xf32>
    %11 = arith.addf %10, %7 : vector<16x16xf32>
    %12 = arith.mulf %2, %2 : vector<16x48xf32>
    %cst_6 = arith.constant dense<0.000000e+00> : vector<16xf32>
    %13 = vector.multi_reduction <add>, %12, %cst_6 [1] : vector<16x48xf32> to vector<16xf32>
    %14 = vector.shape_cast %13 : vector<16xf32> to vector<16x1xf32>
    %15 = arith.mulf %7, %7 : vector<16x16xf32>
    %cst_7 = arith.constant dense<0.000000e+00> : vector<16xf32>
    %16 = vector.multi_reduction <add>, %15, %cst_7 [1] : vector<16x16xf32> to vector<16xf32>
    %17 = vector.shape_cast %16 : vector<16xf32> to vector<16x1xf32>
    %18 = arith.addf %14, %17 : vector<16x1xf32>
    %c0_8 = arith.constant 0 : index
    %c0_9 = arith.constant 0 : index
    %19 = memref.load %arg9[%c0_8, %c0_9] : memref<1x1xf32, #tpu.memory_space<smem>>
    %20 = vector.broadcast %19 : f32 to vector<16x1xf32>
    %21 = arith.addf %20, %4 : vector<16x1xf32>
    %cst_10 = arith.constant dense<0.000000e+00> : vector<16xf32>
    %22 = vector.multi_reduction <add>, %7, %cst_10 [1] : vector<16x16xf32> to vector<16xf32>
    %23 = vector.shape_cast %22 : vector<16xf32> to vector<16x1xf32>
    %24 = arith.addf %21, %23 : vector<16x1xf32>
    %25 = arith.mulf %11, %11 : vector<16x16xf32>
    %cst_11 = arith.constant dense<0.000000e+00> : vector<16xf32>
    %26 = vector.multi_reduction <add>, %25, %cst_11 [1] : vector<16x16xf32> to vector<16xf32>
    %27 = vector.shape_cast %26 : vector<16xf32> to vector<16x1xf32>
    %28 = arith.subf %27, %18 : vector<16x1xf32>
    %cst_12 = arith.constant 5.000000e-01 : f32
    %29 = vector.broadcast %cst_12 : f32 to vector<16x1xf32>
    %30 = arith.mulf %29, %28 : vector<16x1xf32>
    %31 = arith.addf %24, %30 : vector<16x1xf32>
    %c0_13 = arith.constant 0 : index
    %c0_14 = arith.constant 0 : index
    %32 = vector.load %arg4[%c0_13, %c0_14] : memref<128x32xbf16, #tpu.memory_space<vmem>>, vector<128x32xbf16>
    %cst_15 = arith.constant dense<0.000000e+00> : vector<16x32xf32>
    %33 = tpu.matmul %0, %32, %cst_15 {dimension_numbers = #tpu.dot_dimension_numbers<[1], [0], [0], [1], [0, 0, 1, 1], [], []>} : vector<16x128xbf16>, vector<128x32xbf16>, vector<16x32xf32> -> vector<16x32xf32>
    %c0_16 = arith.constant 0 : index
    %c0_17 = arith.constant 0 : index
    %34 = vector.load %arg5[%c0_16, %c0_17] : memref<1x32xf32, #tpu.memory_space<vmem>>, vector<1x32xf32>
    %35 = vector.broadcast %34 : vector<1x32xf32> to vector<16x32xf32>
    %36 = arith.addf %33, %35 : vector<16x32xf32>
    %cst_18 = arith.constant 0.000000e+00 : f32
    %37 = vector.broadcast %cst_18 : f32 to vector<16x32xf32>
    %38 = arith.maximumf %36, %37 : vector<16x32xf32>
    %39 = arith.truncf %38 : vector<16x32xf32> to vector<16x32xbf16>
    %c0_19 = arith.constant 0 : index
    %c0_20 = arith.constant 0 : index
    %40 = vector.load %arg6[%c0_19, %c0_20] : memref<32x16xbf16, #tpu.memory_space<vmem>>, vector<32x16xbf16>
    %cst_21 = arith.constant dense<0.000000e+00> : vector<16x16xf32>
    %41 = tpu.matmul %39, %40, %cst_21 {dimension_numbers = #tpu.dot_dimension_numbers<[1], [0], [0], [1], [0, 0, 1, 1], [], []>} : vector<16x32xbf16>, vector<32x16xbf16>, vector<16x16xf32> -> vector<16x16xf32>
    %c0_22 = arith.constant 0 : index
    %c0_23 = arith.constant 0 : index
    %42 = vector.load %arg7[%c0_22, %c0_23] : memref<1x16xf32, #tpu.memory_space<vmem>>, vector<1x16xf32>
    %43 = vector.broadcast %42 : vector<1x16xf32> to vector<16x16xf32>
    %44 = arith.addf %41, %43 : vector<16x16xf32>
    %cst_24 = arith.constant 0.000000e+00 : f32
    %45 = vector.broadcast %cst_24 : f32 to vector<16x16xf32>
    %46 = arith.maximumf %44, %45 : vector<16x16xf32>
    %c0_25 = arith.constant 0 : index
    %c0_26 = arith.constant 0 : index
    %47 = vector.load %arg8[%c0_25, %c0_26] : memref<1x16xf32, #tpu.memory_space<vmem>>, vector<1x16xf32>
    %48 = vector.broadcast %47 : vector<1x16xf32> to vector<16x16xf32>
    %49 = arith.mulf %46, %48 : vector<16x16xf32>
    %cst_27 = arith.constant dense<0.000000e+00> : vector<16xf32>
    %50 = vector.multi_reduction <add>, %49, %cst_27 [1] : vector<16x16xf32> to vector<16xf32>
    %51 = vector.shape_cast %50 : vector<16xf32> to vector<16x1xf32>
    %52 = arith.addf %31, %51 : vector<16x1xf32>
    %53 = arith.negf %52 : vector<16x1xf32>
    %54 = math.exp %53 : vector<16x1xf32>
    %cst_28 = arith.constant 1.000000e+00 : f32
    %55 = vector.broadcast %cst_28 : f32 to vector<16x1xf32>
    %56 = arith.addf %55, %54 : vector<16x1xf32>
    %57 = arith.divf %55, %56 : vector<16x1xf32>
    %c0_29 = arith.constant 0 : index
    %c0_30 = arith.constant 0 : index
    %58 = vector.load %arg10[%c0_29, %c0_30] : memref<16x1xf32, #tpu.memory_space<vmem>>, vector<16x1xf32>
    tpu.vector_store %arg10[%c0_29, %c0_30], %57 {strides = array<i32>} : memref<16x1xf32, #tpu.memory_space<vmem>>, vector<16x1xf32>,
    return
  }
  func.func @transform_0(%arg0: i32) -> (i32, i32) {
    %c0_i32 = arith.constant 0 : i32
    %c0_i32_0 = arith.constant 0 : i32
    return %arg0, %c0_i32 : i32, i32
  }
  func.func @transform_1(%arg0: i32) -> (i32, i32) {
    %c0_i32 = arith.constant 0 : i32
    %c0_i32_0 = arith.constant 0 : i32
    %c0_i32_1 = arith.constant 0 : i32
    return %c0_i32, %c0_i32_0 : i32, i32
  }
  func.func @transform_2(%arg0: i32) -> (i32, i32) {
    %c0_i32 = arith.constant 0 : i32
    %c0_i32_0 = arith.constant 0 : i32
    %c0_i32_1 = arith.constant 0 : i32
    return %c0_i32, %c0_i32_0 : i32, i32
  }
  func.func @transform_3(%arg0: i32) -> (i32, i32) {
    %c0_i32 = arith.constant 0 : i32
    %c0_i32_0 = arith.constant 0 : i32
    %c0_i32_1 = arith.constant 0 : i32
    return %c0_i32, %c0_i32_0 : i32, i32
  }
  func.func @transform_4(%arg0: i32) -> (i32, i32) {
    %c0_i32 = arith.constant 0 : i32
    %c0_i32_0 = arith.constant 0 : i32
    %c0_i32_1 = arith.constant 0 : i32
    return %c0_i32, %c0_i32_0 : i32, i32
  }
  func.func @transform_5(%arg0: i32) -> (i32, i32) {
    %c0_i32 = arith.constant 0 : i32
    %c0_i32_0 = arith.constant 0 : i32
    %c0_i32_1 = arith.constant 0 : i32
    return %c0_i32, %c0_i32_0 : i32, i32
  }
  func.func @transform_6(%arg0: i32) -> (i32, i32) {
    %c0_i32 = arith.constant 0 : i32
    %c0_i32_0 = arith.constant 0 : i32
    %c0_i32_1 = arith.constant 0 : i32
    return %c0_i32, %c0_i32_0 : i32, i32
  }
  func.func @transform_7(%arg0: i32) -> (i32, i32) {
    %c0_i32 = arith.constant 0 : i32
    %c0_i32_0 = arith.constant 0 : i32
    %c0_i32_1 = arith.constant 0 : i32
    return %c0_i32, %c0_i32_0 : i32, i32
  }
  func.func @transform_8(%arg0: i32) -> (i32, i32) {
    %c0_i32 = arith.constant 0 : i32
    %c0_i32_0 = arith.constant 0 : i32
    %c0_i32_1 = arith.constant 0 : i32
    return %c0_i32, %c0_i32_0 : i32, i32
  }
  func.func @transform_9(%arg0: i32) -> (i32, i32) {
    %c0_i32 = arith.constant 0 : i32
    %c0_i32_0 = arith.constant 0 : i32
    return %arg0, %c0_i32 : i32, i32
  }
}

</mosaic_0001>

<llo_original>
// kernel: tpu_custom_call.1
$region0: #{tpu_custom_call.1}
  #allocation0 [shape = 'u32[]', space=smem, size = 0x4, offset = 0x4, fixed_abs, tag = 'smem constant byte address 0x4 - core index']
  #allocation1 [shape = 'u32[144,128]{1,0:T(1,128)}', space=vmem, size = 0x12000, scoped, tag = 'internal scratch']
  #allocation2 [shape = 'f32[1,1]{1,0:T(1,128)S(6)}', space=smem, size = 0x200, scoped, tag = 'scoped memory for tpu_custom_call.1']
  %s0 = inlined_call_operand.vmem [shape: bf16[48,128], index: 0, kind: input, shape index: {}]
  %s1 = inlined_call_operand.vmem [shape: bf16[18,16], index: 1, kind: input, shape index: {}]
  %s2 = inlined_call_operand.vmem [shape: bf16[48,16], index: 2, kind: input, shape index: {}]
  %s3 = inlined_call_operand.vmem [shape: bf16[128,32], index: 3, kind: input, shape index: {}]
  %s4 = inlined_call_operand.vmem [shape: f32[1,32], index: 4, kind: input, shape index: {}]
  %s5 = inlined_call_operand.vmem [shape: bf16[32,16], index: 5, kind: input, shape index: {}]
  %s6 = inlined_call_operand.vmem [shape: f32[1,16], index: 6, kind: input, shape index: {}]
  %s7 = inlined_call_operand.vmem [shape: f32[1,16], index: 7, kind: input, shape index: {}]
  %s8 = inlined_call_operand.<no memory space> [shape: f32[1,1], index: 8, kind: input, shape index: {}]
  %s9 = inlined_call_operand.vmem [shape: f32[48,1], index: 9, kind: output, shape index: {}]
  %s10 = sld [smem:[#allocation0]]
  $region69: #{tpu_custom_call.1} parent=0
    _
  %s12 = ssub.s32 1, %s10
  %s13 = scalar_select 0, %s12, %s10
  %14 = sst [smem:[#allocation2]] %s8
  loop: start=0, step=1, limit=5
  $region2: #{tpu_custom_call.1} parent=0 // loop_pre_header
    _
  $region3: #{tpu_custom_call.1} parent=0 // loop_header
    %s16 = sphi 0, %s20
    %p17 = scmp.ge.s32.totalorder %s16, 5
    %s26 = sphi 0, %s28
    %s29 = sphi 0, %s26
    %s30 = sphi 0, %s29
    %s46 = sphi 0, %s30
    %s50 = sphi 0, %s50
    %s52 = sphi 0, %s50
    %s53 = sphi 0, %s52
    %s67 = sphi 0, %s53
    %s71 = sphi 0, %s71
    %s73 = sphi 0, %s71
    %s74 = sphi 0, %s73
    %s88 = sphi 0, %s74
    %s92 = sphi 0, %s92
    %s94 = sphi 0, %s92
    %s95 = sphi 0, %s94
    %s109 = sphi 0, %s95
    %s113 = sphi 0, %s113
    %s115 = sphi 0, %s113
    %s116 = sphi 0, %s115
    %s130 = sphi 0, %s116
    %s134 = sphi 0, %s134
    %s136 = sphi 0, %s134
    %s137 = sphi 0, %s136
    %s151 = sphi 0, %s137
    %s155 = sphi 0, %s155
    %s157 = sphi 0, %s155
    %s158 = sphi 0, %s157
    %s172 = sphi 0, %s158
    %s176 = sphi 0, %s176
    %s178 = sphi 0, %s176
    %s179 = sphi 0, %s178
    %s193 = sphi 0, %s179
    %s197 = sphi 0, %s197
    %s199 = sphi 0, %s197
    %s200 = sphi 0, %s199
    %s214 = sphi 0, %s200
    %s220 = sphi 0, %s222
    %s223 = sphi 0, %s220
    %s224 = sphi 0, %s223
    %s240 = sphi 0, %s224
  $region4: #{tpu_custom_call.1} parent=0 // loop_header_branch
    %19 = sbr.rel (%p17) target = $region8
  $region5: #{tpu_custom_call.1} parent=0 // loop_body
    %s21 = ssub.s32 %s16, 1
    %s22 = ssub.s32 %s16, 2
    %s23 = sadd.s32 %s16, 1
    %s24 = ssub.s32 %s16, %s23
    %p25 = scmp.eq.s32.totalorder %s24, 0
    %s27 = sadd.s32 %s26, 1
    %s28 = scalar_select %p25, %s26, %s27
    %p31 = pneg %p25
    %p32 = scmp.eq.s32.totalorder %s16, 2
    %p33 = por %p31, %p32
    %p34 = scmp.ne.s32.totalorder %s26, %s29
    %p35 = scmp.eq.s32.totalorder %s16, 0
    %p36 = por %p34, %p35
    %p37 = scmp.ne.s32.totalorder %s26, %s29
    %p38 = scmp.eq.s32.totalorder %s21, 2
    %p39 = por %p37, %p38
    %p40 = scmp.ne.s32.totalorder %s29, %s30
    %p41 = scmp.eq.s32.totalorder %s21, 0
    %p42 = por %p40, %p41
    %p43 = scmp.ne.s32.totalorder %s29, %s30
    %p44 = scmp.eq.s32.totalorder %s22, 2
    %p45 = por %p43, %p44
    %p47 = scmp.ne.s32.totalorder %s30, %s46
    %p48 = scmp.eq.s32.totalorder %s22, 0
    %p49 = por %p47, %p48
    %s51 = sadd.s32 %s50, 1
    %p54 = scmp.eq.s32.totalorder %s16, 2
    %p55 = scmp.ne.s32.totalorder %s50, %s52
    %p56 = scmp.eq.s32.totalorder %s16, 0
    %p57 = por %p55, %p56
    %p58 = scmp.ne.s32.totalorder %s50, %s52
    %p59 = scmp.eq.s32.totalorder %s21, 2
    %p60 = por %p58, %p59
    %p61 = scmp.ne.s32.totalorder %s52, %s53
    %p62 = scmp.eq.s32.totalorder %s21, 0
    %p63 = por %p61, %p62
    %p64 = scmp.ne.s32.totalorder %s52, %s53
    %p65 = scmp.eq.s32.totalorder %s22, 2
    %p66 = por %p64, %p65
    %p68 = scmp.ne.s32.totalorder %s53, %s67
    %p69 = scmp.eq.s32.totalorder %s22, 0
    %p70 = por %p68, %p69
    %s72 = sadd.s32 %s71, 1
    %p75 = scmp.eq.s32.totalorder %s16, 2
    %p76 = scmp.ne.s32.totalorder %s71, %s73
    %p77 = scmp.eq.s32.totalorder %s16, 0
    %p78 = por %p76, %p77
    %p79 = scmp.ne.s32.totalorder %s71, %s73
    %p80 = scmp.eq.s32.totalorder %s21, 2
    %p81 = por %p79, %p80
    %p82 = scmp.ne.s32.totalorder %s73, %s74
    %p83 = scmp.eq.s32.totalorder %s21, 0
    %p84 = por %p82, %p83
    %p85 = scmp.ne.s32.totalorder %s73, %s74
    %p86 = scmp.eq.s32.totalorder %s22, 2
    %p87 = por %p85, %p86
    %p89 = scmp.ne.s32.totalorder %s74, %s88
    %p90 = scmp.eq.s32.totalorder %s22, 0
    %p91 = por %p89, %p90
    %s93 = sadd.s32 %s92, 1
    %p96 = scmp.eq.s32.totalorder %s16, 2
    %p97 = scmp.ne.s32.totalorder %s92, %s94
    %p98 = scmp.eq.s32.totalorder %s16, 0
    %p99 = por %p97, %p98
    %p100 = scmp.ne.s32.totalorder %s92, %s94
    %p101 = scmp.eq.s32.totalorder %s21, 2
    %p102 = por %p100, %p101
    %p103 = scmp.ne.s32.totalorder %s94, %s95
    %p104 = scmp.eq.s32.totalorder %s21, 0
    %p105 = por %p103, %p104
    %p106 = scmp.ne.s32.totalorder %s94, %s95
    %p107 = scmp.eq.s32.totalorder %s22, 2
    %p108 = por %p106, %p107
    %p110 = scmp.ne.s32.totalorder %s95, %s109
    %p111 = scmp.eq.s32.totalorder %s22, 0
    %p112 = por %p110, %p111
    %s114 = sadd.s32 %s113, 1
    %p117 = scmp.eq.s32.totalorder %s16, 2
    %p118 = scmp.ne.s32.totalorder %s113, %s115
    %p119 = scmp.eq.s32.totalorder %s16, 0
    %p120 = por %p118, %p119
    %p121 = scmp.ne.s32.totalorder %s113, %s115
    %p122 = scmp.eq.s32.totalorder %s21, 2
    %p123 = por %p121, %p122
    %p124 = scmp.ne.s32.totalorder %s115, %s116
    %p125 = scmp.eq.s32.totalorder %s21, 0
    %p126 = por %p124, %p125
    %p127 = scmp.ne.s32.totalorder %s115, %s116
    %p128 = scmp.eq.s32.totalorder %s22, 2
    %p129 = por %p127, %p128
    %p131 = scmp.ne.s32.totalorder %s116, %s130
    %p132 = scmp.eq.s32.totalorder %s22, 0
    %p133 = por %p131, %p132
    %s135 = sadd.s32 %s134, 1
    %p138 = scmp.eq.s32.totalorder %s16, 2
    %p139 = scmp.ne.s32.totalorder %s134, %s136
    %p140 = scmp.eq.s32.totalorder %s16, 0
    %p141 = por %p139, %p140
    %p142 = scmp.ne.s32.totalorder %s134, %s136
    %p143 = scmp.eq.s32.totalorder %s21, 2
    %p144 = por %p142, %p143
    %p145 = scmp.ne.s32.totalorder %s136, %s137
    %p146 = scmp.eq.s32.totalorder %s21, 0
    %p147 = por %p145, %p146
    %p148 = scmp.ne.s32.totalorder %s136, %s137
    %p149 = scmp.eq.s32.totalorder %s22, 2
    %p150 = por %p148, %p149
    %p152 = scmp.ne.s32.totalorder %s137, %s151
    %p153 = scmp.eq.s32.totalorder %s22, 0
    %p154 = por %p152, %p153
    %s156 = sadd.s32 %s155, 1
    %p159 = scmp.eq.s32.totalorder %s16, 2
    %p160 = scmp.ne.s32.totalorder %s155, %s157
    %p161 = scmp.eq.s32.totalorder %s16, 0
    %p162 = por %p160, %p161
    %p163 = scmp.ne.s32.totalorder %s155, %s157
    %p164 = scmp.eq.s32.totalorder %s21, 2
    %p165 = por %p163, %p164
    %p166 = scmp.ne.s32.totalorder %s157, %s158
    %p167 = scmp.eq.s32.totalorder %s21, 0
    %p168 = por %p166, %p167
    %p169 = scmp.ne.s32.totalorder %s157, %s158
    %p170 = scmp.eq.s32.totalorder %s22, 2
    %p171 = por %p169, %p170
    %p173 = scmp.ne.s32.totalorder %s158, %s172
    %p174 = scmp.eq.s32.totalorder %s22, 0
    %p175 = por %p173, %p174
    %s177 = sadd.s32 %s176, 1
    %p180 = scmp.eq.s32.totalorder %s16, 2
    %p181 = scmp.ne.s32.totalorder %s176, %s178
    %p182 = scmp.eq.s32.totalorder %s16, 0
    %p183 = por %p181, %p182
    %p184 = scmp.ne.s32.totalorder %s176, %s178
    %p185 = scmp.eq.s32.totalorder %s21, 2
    %p186 = por %p184, %p185
    %p187 = scmp.ne.s32.totalorder %s178, %s179
    %p188 = scmp.eq.s32.totalorder %s21, 0
    %p189 = por %p187, %p188
    %p190 = scmp.ne.s32.totalorder %s178, %s179
    %p191 = scmp.eq.s32.totalorder %s22, 2
    %p192 = por %p190, %p191
    %p194 = scmp.ne.s32.totalorder %s179, %s193
    %p195 = scmp.eq.s32.totalorder %s22, 0
    %p196 = por %p194, %p195
    %s198 = sadd.s32 %s197, 1
    %p201 = scmp.eq.s32.totalorder %s16, 2
    %p202 = scmp.ne.s32.totalorder %s197, %s199
    %p203 = scmp.eq.s32.totalorder %s16, 0
    %p204 = por %p202, %p203
    %p205 = scmp.ne.s32.totalorder %s197, %s199
    %p206 = scmp.eq.s32.totalorder %s21, 2
    %p207 = por %p205, %p206
    %p208 = scmp.ne.s32.totalorder %s199, %s200
    %p209 = scmp.eq.s32.totalorder %s21, 0
    %p210 = por %p208, %p209
    %p211 = scmp.ne.s32.totalorder %s199, %s200
    %p212 = scmp.eq.s32.totalorder %s22, 2
    %p213 = por %p211, %p212
    %p215 = scmp.ne.s32.totalorder %s200, %s214
    %p216 = scmp.eq.s32.totalorder %s22, 0
    %p217 = por %p215, %p216
    %s218 = ssub.s32 %s16, %s23
    %p219 = scmp.eq.s32.totalorder %s218, 0
    %s221 = sadd.s32 %s220, 1
    %s222 = scalar_select %p219, %s220, %s221
    %p225 = pneg %p219
    %p226 = scmp.eq.s32.totalorder %s16, 2
    %p227 = por %p225, %p226
    %p228 = scmp.ne.s32.totalorder %s220, %s223
    %p229 = scmp.eq.s32.totalorder %s16, 0
    %p230 = por %p228, %p229
    %p231 = scmp.ne.s32.totalorder %s220, %s223
    %p232 = scmp.eq.s32.totalorder %s21, 2
    %p233 = por %p231, %p232
    %p234 = scmp.ne.s32.totalorder %s223, %s224
    %p235 = scmp.eq.s32.totalorder %s21, 0
    %p236 = por %p234, %p235
    %p237 = scmp.ne.s32.totalorder %s223, %s224
    %p238 = scmp.eq.s32.totalorder %s22, 2
    %p239 = por %p237, %p238
    %p241 = scmp.ne.s32.totalorder %s224, %s240
    %p242 = scmp.eq.s32.totalorder %s22, 0
    %p243 = por %p241, %p242
    %p244 = scmp.le.s32.totalorder 1, %s16
    %p245 = scmp.lt.s32.totalorder %s16, 4
    %p246 = pnand %p244, %p245
    %p247 = pneg %p246
    // Predicated region
    $region9: #{tpu_custom_call.1} parent=5 // pred_check
      _
    $region10: #{tpu_custom_call.1} parent=5 // pred_check_branch
      %249 = sbr.rel (%p246) target = $region12
    $region11: #{tpu_custom_call.1} parent=5 // pred_region
      %s250 = ssub.s32 %s16, 1
      // Predicated region
      $region13: #{tpu_custom_call.1} parent=11 // pred_check
        %p251 = pneg %p63
      $region14: #{tpu_custom_call.1} parent=11 // pred_check_branch
        %253 = sbr.rel (%p251) target = $region16
      $region15: #{tpu_custom_call.1} parent=11 // pred_region
        _
      $region16: #{tpu_custom_call.1} parent=11 // pred_fallthru
        _
      // Predicated region
      $region17: #{tpu_custom_call.1} parent=11 // pred_check
        %p254 = pneg %p84
      $region18: #{tpu_custom_call.1} parent=11 // pred_check_branch
        %256 = sbr.rel (%p254) target = $region20
      $region19: #{tpu_custom_call.1} parent=11 // pred_region
        _
      $region20: #{tpu_custom_call.1} parent=11 // pred_fallthru
        _
      // Predicated region
      $region21: #{tpu_custom_call.1} parent=11 // pred_check
        %p257 = pneg %p105
      $region22: #{tpu_custom_call.1} parent=11 // pred_check_branch
        %259 = sbr.rel (%p257) target = $region24
      $region23: #{tpu_custom_call.1} parent=11 // pred_region
        _
      $region24: #{tpu_custom_call.1} parent=11 // pred_fallthru
        _
      // Predicated region
      $region25: #{tpu_custom_call.1} parent=11 // pred_check
        %p260 = pneg %p126
      $region26: #{tpu_custom_call.1} parent=11 // pred_check_branch
        %262 = sbr.rel (%p260) target = $region28
      $region27: #{tpu_custom_call.1} parent=11 // pred_region
        _
      $region28: #{tpu_custom_call.1} parent=11 // pred_fallthru
        _
      // Predicated region
      $region29: #{tpu_custom_call.1} parent=11 // pred_check
        %p263 = pneg %p147
      $region30: #{tpu_custom_call.1} parent=11 // pred_check_branch
        %265 = sbr.rel (%p263) target = $region32
      $region31: #{tpu_custom_call.1} parent=11 // pred_region
        _
      $region32: #{tpu_custom_call.1} parent=11 // pred_fallthru
        _
      // Predicated region
      $region33: #{tpu_custom_call.1} parent=11 // pred_check
        %p266 = pneg %p168
      $region34: #{tpu_custom_call.1} parent=11 // pred_check_branch
        %268 = sbr.rel (%p266) target = $region36
      $region35: #{tpu_custom_call.1} parent=11 // pred_region
        _
      $region36: #{tpu_custom_call.1} parent=11 // pred_fallthru
        _
      // Predicated region
      $region37: #{tpu_custom_call.1} parent=11 // pred_check
        %p269 = pneg %p189
      $region38: #{tpu_custom_call.1} parent=11 // pred_check_branch
        %271 = sbr.rel (%p269) target = $region40
      $region39: #{tpu_custom_call.1} parent=11 // pred_region
        _
      $region40: #{tpu_custom_call.1} parent=11 // pred_fallthru
        _
      // Predicated region
      $region41: #{tpu_custom_call.1} parent=11 // pred_check
        %p272 = pneg %p210
      $region42: #{tpu_custom_call.1} parent=11 // pred_check_branch
        %274 = sbr.rel (%p272) target = $region44
      $region43: #{tpu_custom_call.1} parent=11 // pred_region
        _
      $region44: #{tpu_custom_call.1} parent=11 // pred_fallthru
        _
    $region12: #{tpu_custom_call.1} parent=5 // pred_fallthru
      _
    %p275 = scmp.lt.s32.totalorder %s16, 3
    // Predicated region
    $region45: #{tpu_custom_call.1} parent=5 // pred_check
      %p276 = pneg %p275
    $region46: #{tpu_custom_call.1} parent=5 // pred_check_branch
      %278 = sbr.rel (%p276) target = $region48
    $region47: #{tpu_custom_call.1} parent=5 // pred_region
      // Predicated region
      $region49: #{tpu_custom_call.1} parent=47 // pred_check
        %p279 = pneg %p36
      $region50: #{tpu_custom_call.1} parent=47 // pred_check_branch
        %281 = sbr.rel (%p279) target = $region52
      $region51: #{tpu_custom_call.1} parent=47 // pred_region
        %s282 = smul.u32 2, %s16
        %p283 = scmp.lt.s32.totalorder %s282, 5
        %s284 = scalar_select %p283, %s282, 5
        %s285 = smul.addr %s284, 4
        %s286 = scalar_lea.vmem %s0, %s285
        %s287 = smul.u32 2, %s16
      $region52: #{tpu_custom_call.1} parent=47 // pred_fallthru
        _
    $region48: #{tpu_custom_call.1} parent=5 // pred_fallthru
      _
    %p288 = scmp.le.s32.totalorder 1, %s16
    %p289 = scmp.lt.s32.totalorder %s16, 4
    %p290 = pnand %p288, %p289
    %p291 = pneg %p290
    // Predicated region
    $region53: #{tpu_custom_call.1} parent=5 // pred_check
      _
    $region54: #{tpu_custom_call.1} parent=5 // pred_check_branch
      %293 = sbr.rel (%p290) target = $region56
    $region55: #{tpu_custom_call.1} parent=5 // pred_region
      %s294 = ssub.s32 %s16, 1
      %s295 = smul.u32 2, %s21
      %p296 = scmp.lt.s32.totalorder %s295, 5
      %s297 = scalar_select %p296, %s295, 5
      %s298 = smul.addr %s297, 4
      %s299 = scalar_lea.vmem %s0, %s298
      %p300 = pneg %p42
      %p301 = pneg %p39
      %p302 = pneg %p63
      %p303 = pneg %p60
      %p304 = pneg %p84
      %p305 = pneg %p81
      %p306 = pneg %p105
      %p307 = pneg %p102
      %p308 = pneg %p126
      %p309 = pneg %p123
      %p310 = pneg %p147
      %p311 = pneg %p144
      %p312 = pneg %p168
      %p313 = pneg %p165
      %p314 = pneg %p189
      %p315 = pneg %p186
      %p316 = pneg %p210
      %p317 = pneg %p207
      %p318 = pneg %p236
      %p319 = pneg %p233
      %s320 = smul.u32 2, %s21
      %p321 = scmp.lt.s32.totalorder %s320, 5
      %s322 = scalar_select %p321, %s320, 5
      %s323 = smul.addr %s322, 8
      %s324 = scalar_lea.vmem %s9, %s323
      %s325 = smul.u32 2, %s21
      %p326 = scmp.lt.s32.totalorder %s325, 5
      %s327 = scalar_select %p326, %s325, 5
      %s328 = smul.addr %s327, 4
      %s329 = scalar_lea.vmem %s0, %s328
      %s330 = smul.u32 2, %s21
      %s331 = smul.u32 2, %s21
      %p332 = scmp.lt.s32.totalorder %s331, 5
      %s333 = scalar_select %p332, %s331, 5
      %s334 = smul.addr %s333, 8
      %s335 = scalar_lea.vmem %s9, %s334
      %s336 = smul.u32 2, %s21
      %v338 = vld [vmem:[%s329] sm:$0xf]
      %v339 = vld [vmem:[%s329 + $0x4] sm:$0xf]
      %v340 = vunpack.c.l.bf16 %v338
      %v341 = vunpack.c.l.bf16 %v339
      %v342 = vpack.c.bf16 %v341, %v340
      %v343 = vld [vmem:[%s1] sm:$0xf]
      %v344 = vld [vmem:[%s1 + $0x4] sm:$0xf]
      %v345 = vld [vmem:[%s1 + $0x8] sm:$0x1]
      %347 = vrot.lane.b32.xlu0 %v342, 80
      %v348 = vpop.permute.xlu0 %347
      %v352 = vunpack.c.l.b16 %v343
      %v353 = vunpack.c.l.b16 %v344
      %v354 = vunpack.c.l.b16 %v345
      %v355 = vpack.c.b16 %v353, %v352
      %v356 = vpack.c.b16 %v354, %v354
      %vm358 = vcmask 146432
      %v360 = vsel %vm358, %v348, 0
      %vm362 = vcmask 1040384
      %v364 = vsel %vm362, %v356, 0
      %366 = vmatprep.subr.bf16.mxu0 0
      %367 = vmatpush1.bf16.msra.mxu0 %v355
      %368 = vmatprep.subr.bf16.mxu0 0
      %369 = vmatpush1.bf16.msra.mxu0 %v364
      %370 = vmatprep.subr.bf16.mxu0 0
      %371 = vmatpush1.bf16.msra.mxu0 0
      %372 = vmatprep.subr.bf16.mxu0 0
      %373 = vmatpush1.bf16.msra.mxu0 0
      %374 = vmatprep.subr.bf16.mxu0 0
      %375 = vmatpush1.bf16.msra.mxu0 0
      %376 = vmatprep.subr.bf16.mxu0 0
      %377 = vmatpush1.bf16.msra.mxu0 0
      %378 = vmatprep.subr.bf16.mxu0 0
      %379 = vmatpush1.bf16.msra.mxu0 0
      %380 = vmatprep.subr.bf16.mxu0 0
      %381 = vmatpush1.bf16.msra.mxu0 0
      %382 = vmatprep.subr.bf16.mxu0 0
      %383 = vmatpush1.bf16.msra.mxu0 0
      %384 = vmatprep.subr.bf16.mxu0 0
      %385 = vmatpush1.bf16.msra.mxu0 0
      %386 = vmatprep.subr.bf16.mxu0 0
      %387 = vmatpush1.bf16.msra.mxu0 0
      %388 = vmatprep.subr.bf16.mxu0 0
      %389 = vmatpush1.bf16.msra.mxu0 0
      %390 = vmatprep.subr.bf16.mxu0 0
      %391 = vmatpush1.bf16.msra.mxu0 0
      %392 = vmatprep.subr.bf16.mxu0 0
      %393 = vmatpush1.bf16.msra.mxu0 0
      %394 = vmatprep.subr.bf16.mxu0 0
      %395 = vmatpush1.bf16.msra.mxu0 0
      %396 = vmatprep.subr.bf16.mxu0 0
      %397 = vmatpush1.bf16.msra.mxu0 0
      %398 = vmatprep.mubr.bf16.mxu0 0
      %399 = vmatmul.mubr.bf16.gmra.mrb[0].mxu0 %v360
      %v400 = vpop.f32.mrb[0].mxu0
      %v401 = vadd.f32 0.0, %v400
      %v402 = vpop.f32.mrb[0].mxu0
      %v403 = vpop.f32.mrb[0].mxu0
      %v404 = vadd.f32 0.0, %v403
      %v405 = vpop.f32.mrb[0].mxu0
      %406 = vdwg.mxu0
      %v407 = vld [vmem:[%s2] sm:$0xf]
      %v408 = vld [vmem:[%s2 + $0x4] sm:$0xf]
      %v409 = vld [vmem:[%s2 + $0x8] sm:$0xf]
      %v410 = vld [vmem:[%s2 + $0xc] sm:$0xf]
      %v411 = vld [vmem:[%s2 + $0x10] sm:$0xf]
      %v412 = vld [vmem:[%s2 + $0x14] sm:$0xf]
      %v419 = vunpack.c.l.b16 %v407
      %v420 = vunpack.c.l.b16 %v408
      %v421 = vunpack.c.l.b16 %v409
      %v422 = vunpack.c.l.b16 %v410
      %v423 = vunpack.c.l.b16 %v411
      %v424 = vunpack.c.l.b16 %v412
      %v425 = vpack.c.b16 %v420, %v419
      %v426 = vpack.c.b16 %v422, %v421
      %v427 = vpack.c.b16 %v424, %v423
      %vm431 = vcmask 392192
      %v433 = vsel %vm431, %v342, 0
      %435 = vmatprep.subr.bf16.mxu0 0
      %436 = vmatpush1.bf16.msra.mxu0 %v425
      %437 = vmatprep.subr.bf16.mxu0 0
      %438 = vmatpush1.bf16.msra.mxu0 %v426
      %439 = vmatprep.subr.bf16.mxu0 0
      %440 = vmatpush1.bf16.msra.mxu0 %v427
      %441 = vmatprep.subr.bf16.mxu0 0
      %442 = vmatpush1.bf16.msra.mxu0 0
      %443 = vmatprep.subr.bf16.mxu0 0
      %444 = vmatpush1.bf16.msra.mxu0 0
      %445 = vmatprep.subr.bf16.mxu0 0
      %446 = vmatpush1.bf16.msra.mxu0 0
      %447 = vmatprep.subr.bf16.mxu0 0
      %448 = vmatpush1.bf16.msra.mxu0 0
      %449 = vmatprep.subr.bf16.mxu0 0
      %450 = vmatpush1.bf16.msra.mxu0 0
      %451 = vmatprep.subr.bf16.mxu0 0
      %452 = vmatpush1.bf16.msra.mxu0 0
      %453 = vmatprep.subr.bf16.mxu0 0
      %454 = vmatpush1.bf16.msra.mxu0 0
      %455 = vmatprep.subr.bf16.mxu0 0
      %456 = vmatpush1.bf16.msra.mxu0 0
      %457 = vmatprep.subr.bf16.mxu0 0
      %458 = vmatpush1.bf16.msra.mxu0 0
      %459 = vmatprep.subr.bf16.mxu0 0
      %460 = vmatpush1.bf16.msra.mxu0 0
      %461 = vmatprep.subr.bf16.mxu0 0
      %462 = vmatpush1.bf16.msra.mxu0 0
      %463 = vmatprep.subr.bf16.mxu0 0
      %464 = vmatpush1.bf16.msra.mxu0 0
      %465 = vmatprep.subr.bf16.mxu0 0
      %466 = vmatpush1.bf16.msra.mxu0 0
      %467 = vmatprep.mubr.bf16.mxu0 0
      %468 = vmatmul.mubr.bf16.gmra.mrb[0].mxu0 %v433
      %v469 = vpop.f32.mrb[0].mxu0
      %v470 = vadd.f32 %v401, %v469
      %v471 = vpop.f32.mrb[0].mxu0
      %v472 = vpop.f32.mrb[0].mxu0
      %v473 = vadd.f32 %v404, %v472
      %v474 = vpop.f32.mrb[0].mxu0
      %475 = vdwg.mxu0
      %v476 = vmul.f32 %v340, %v340
      %v477 = vmul.f32 %v341, %v341
      %v478 = vsel %vm431, %v476, 0.0
      %479 = vadd.xlane.f32.xlu0 %v478
      %v480 = vpop.xlane.xlu0 %479
      %v481 = vsel %vm431, %v477, 0.0
      %482 = vadd.xlane.f32.xlu0 %v481
      %v483 = vpop.xlane.xlu0 %482
      %v484 = vmul.f32 %v401, %v401
      %v485 = vmul.f32 %v404, %v404
      %vm486 = vcmask 130048
      %v487 = vsel %vm486, %v484, 0.0
      %488 = vadd.xlane.f32.xlu0 %v487
      %v489 = vpop.xlane.xlu0 %488
      %v490 = vsel %vm486, %v485, 0.0
      %491 = vadd.xlane.f32.xlu0 %v490
      %v492 = vpop.xlane.xlu0 %491
      %v493 = vadd.f32 %v480, %v489
      %v494 = vadd.f32 %v483, %v492
      %s495 = sld [smem:[#allocation2]]
      %v496 = vstv %s495
      %v497 = vadd.f32 %v496, %v340
      %v498 = vadd.f32 %v496, %v341
      %v499 = vsel %vm486, %v401, 0.0
      %500 = vadd.xlane.f32.xlu0 %v499
      %v501 = vpop.xlane.xlu0 %500
      %v502 = vsel %vm486, %v404, 0.0
      %503 = vadd.xlane.f32.xlu0 %v502
      %v504 = vpop.xlane.xlu0 %503
      %v505 = vadd.f32 %v497, %v501
      %v506 = vadd.f32 %v498, %v504
      %v507 = vmul.f32 %v470, %v470
      %v508 = vmul.f32 %v473, %v473
      %v509 = vsel %vm486, %v507, 0.0
      %510 = vadd.xlane.f32.xlu0 %v509
      %v511 = vpop.xlane.xlu0 %510
      %v512 = vsel %vm486, %v508, 0.0
      %513 = vadd.xlane.f32.xlu0 %v512
      %v514 = vpop.xlane.xlu0 %513
      %v515 = vsub.f32 %v511, %v493
      %v516 = vsub.f32 %v514, %v494
      %v517 = vmul.f32 %v515, 0.5
      %v518 = vmul.f32 %v516, 0.5
      %v519 = vadd.f32 %v505, %v517
      %v520 = vadd.f32 %v506, %v518
      %v521 = vld [vmem:[%s3] sm:$0xf]
      %v522 = vld [vmem:[%s3 + $0x4] sm:$0xf]
      %v523 = vld [vmem:[%s3 + $0x8] sm:$0xf]
      %v524 = vld [vmem:[%s3 + $0xc] sm:$0xf]
      %v525 = vld [vmem:[%s3 + $0x10] sm:$0xf]
      %v526 = vld [vmem:[%s3 + $0x14] sm:$0xf]
      %v527 = vld [vmem:[%s3 + $0x18] sm:$0xf]
      %v528 = vld [vmem:[%s3 + $0x1c] sm:$0xf]
      %v529 = vld [vmem:[%s3 + $0x20] sm:$0xf]
      %v530 = vld [vmem:[%s3 + $0x24] sm:$0xf]
      %v531 = vld [vmem:[%s3 + $0x28] sm:$0xf]
      %v532 = vld [vmem:[%s3 + $0x2c] sm:$0xf]
      %v533 = vld [vmem:[%s3 + $0x30] sm:$0xf]
      %v534 = vld [vmem:[%s3 + $0x34] sm:$0xf]
      %v535 = vld [vmem:[%s3 + $0x38] sm:$0xf]
      %v536 = vld [vmem:[%s3 + $0x3c] sm:$0xf]
      %v537 = vld [vmem:[%s4] sm:$0x1]
      %v539 = vlaneseq
      %v540 = vshrl.u32 %v539, 7
      %v541 = vsub.s32 0, %v540
      %v542 = vrot.slane %v537, %v541
      %v546 = vunpack.c.l.b16 %v338
      %v547 = vunpack.c.l.b16 %v339
      %v548 = vpack.c.b16 %v547, %v546
      %v566 = vunpack.c.l.b16 %v521
      %v567 = vunpack.c.l.b16 %v522
      %v568 = vunpack.c.l.b16 %v523
      %v569 = vunpack.c.l.b16 %v524
      %v570 = vunpack.c.l.b16 %v525
      %v571 = vunpack.c.l.b16 %v526
      %v572 = vunpack.c.l.b16 %v527
      %v573 = vunpack.c.l.b16 %v528
      %v574 = vunpack.c.l.b16 %v529
      %v575 = vunpack.c.l.b16 %v530
      %v576 = vunpack.c.l.b16 %v531
      %v577 = vunpack.c.l.b16 %v532
      %v578 = vunpack.c.l.b16 %v533
      %v579 = vunpack.c.l.b16 %v534
      %v580 = vunpack.c.l.b16 %v535
      %v581 = vunpack.c.l.b16 %v536
      %v582 = vpack.c.b16 %v567, %v566
      %v583 = vpack.c.b16 %v569, %v568
      %v584 = vpack.c.b16 %v571, %v570
      %v585 = vpack.c.b16 %v573, %v572
      %v586 = vpack.c.b16 %v575, %v574
      %v587 = vpack.c.b16 %v577, %v576
      %v588 = vpack.c.b16 %v579, %v578
      %v589 = vpack.c.b16 %v581, %v580
      %598 = vmatprep.subr.bf16.mxu0 0
      %599 = vmatpush1.bf16.msra.mxu0 %v582
      %600 = vmatprep.subr.bf16.mxu0 0
      %601 = vmatpush1.bf16.msra.mxu0 %v583
      %602 = vmatprep.subr.bf16.mxu0 0
      %603 = vmatpush1.bf16.msra.mxu0 %v584
      %604 = vmatprep.subr.bf16.mxu0 0
      %605 = vmatpush1.bf16.msra.mxu0 %v585
      %606 = vmatprep.subr.bf16.mxu0 0
      %607 = vmatpush1.bf16.msra.mxu0 %v586
      %608 = vmatprep.subr.bf16.mxu0 0
      %609 = vmatpush1.bf16.msra.mxu0 %v587
      %610 = vmatprep.subr.bf16.mxu0 0
      %611 = vmatpush1.bf16.msra.mxu0 %v588
      %612 = vmatprep.subr.bf16.mxu0 0
      %613 = vmatpush1.bf16.msra.mxu0 %v589
      %614 = vmatprep.subr.bf16.mxu0 0
      %615 = vmatpush1.bf16.msra.mxu0 0
      %616 = vmatprep.subr.bf16.mxu0 0
      %617 = vmatpush1.bf16.msra.mxu0 0
      %618 = vmatprep.subr.bf16.mxu0 0
      %619 = vmatpush1.bf16.msra.mxu0 0
      %620 = vmatprep.subr.bf16.mxu0 0
      %621 = vmatpush1.bf16.msra.mxu0 0
      %622 = vmatprep.subr.bf16.mxu0 0
      %623 = vmatpush1.bf16.msra.mxu0 0
      %624 = vmatprep.subr.bf16.mxu0 0
      %625 = vmatpush1.bf16.msra.mxu0 0
      %626 = vmatprep.subr.bf16.mxu0 0
      %627 = vmatpush1.bf16.msra.mxu0 0
      %628 = vmatprep.subr.bf16.mxu0 0
      %629 = vmatpush1.bf16.msra.mxu0 0
      %630 = vmatprep.mubr.bf16.mxu0 0
      %631 = vmatmul.mubr.bf16.gmra.mrb[0].mxu0 %v548
      %v632 = vpop.f32.mrb[0].mxu0
      %v633 = vadd.f32 %v542, %v632
      %v634 = vpop.f32.mrb[0].mxu0
      %v635 = vpop.f32.mrb[0].mxu0
      %v636 = vadd.f32 %v542, %v635
      %v637 = vpop.f32.mrb[0].mxu0
      %638 = vdwg.mxu0
      %v639 = vmax.f32 %v633, 0.0
      %v640 = vmax.f32 %v636, 0.0
      %v641 = vpack.c.bf16 %v640, %v639
      %v642 = vld [vmem:[%s5] sm:$0xf]
      %v643 = vld [vmem:[%s5 + $0x4] sm:$0xf]
      %v644 = vld [vmem:[%s5 + $0x8] sm:$0xf]
      %v645 = vld [vmem:[%s5 + $0xc] sm:$0xf]
      %v646 = vld [vmem:[%s6] sm:$0x1]
      %v648 = vlaneseq
      %v649 = vshrl.u32 %v648, 7
      %v650 = vsub.s32 0, %v649
      %v651 = vrot.slane %v646, %v650
      %v657 = vunpack.c.l.b16 %v642
      %v658 = vunpack.c.l.b16 %v643
      %v659 = vunpack.c.l.b16 %v644
      %v660 = vunpack.c.l.b16 %v645
      %v661 = vpack.c.b16 %v658, %v657
      %v662 = vpack.c.b16 %v660, %v659
      %vm665 = vcmask 261120
      %v667 = vsel %vm665, %v641, 0
      %669 = vmatprep.subr.bf16.mxu0 0
      %670 = vmatpush1.bf16.msra.mxu0 %v661
      %671 = vmatprep.subr.bf16.mxu0 0
      %672 = vmatpush1.bf16.msra.mxu0 %v662
      %673 = vmatprep.subr.bf16.mxu0 0
      %674 = vmatpush1.bf16.msra.mxu0 0
      %675 = vmatprep.subr.bf16.mxu0 0
      %676 = vmatpush1.bf16.msra.mxu0 0
      %677 = vmatprep.subr.bf16.mxu0 0
      %678 = vmatpush1.bf16.msra.mxu0 0
      %679 = vmatprep.subr.bf16.mxu0 0
      %680 = vmatpush1.bf16.msra.mxu0 0
      %681 = vmatprep.subr.bf16.mxu0 0
      %682 = vmatpush1.bf16.msra.mxu0 0
      %683 = vmatprep.subr.bf16.mxu0 0
      %684 = vmatpush1.bf16.msra.mxu0 0
      %685 = vmatprep.subr.bf16.mxu0 0
      %686 = vmatpush1.bf16.msra.mxu0 0
      %687 = vmatprep.subr.bf16.mxu0 0
      %688 = vmatpush1.bf16.msra.mxu0 0
      %689 = vmatprep.subr.bf16.mxu0 0
      %690 = vmatpush1.bf16.msra.mxu0 0
      %691 = vmatprep.subr.bf16.mxu0 0
      %692 = vmatpush1.bf16.msra.mxu0 0
      %693 = vmatprep.subr.bf16.mxu0 0
      %694 = vmatpush1.bf16.msra.mxu0 0
      %695 = vmatprep.subr.bf16.mxu0 0
      %696 = vmatpush1.bf16.msra.mxu0 0
      %697 = vmatprep.subr.bf16.mxu0 0
      %698 = vmatpush1.bf16.msra.mxu0 0
      %699 = vmatprep.subr.bf16.mxu0 0
      %700 = vmatpush1.bf16.msra.mxu0 0
      %701 = vmatprep.mubr.bf16.mxu0 0
      %702 = vmatmul.mubr.bf16.gmra.mrb[0].mxu0 %v667
      %v703 = vpop.f32.mrb[0].mxu0
      %v704 = vadd.f32 %v651, %v703
      %v705 = vpop.f32.mrb[0].mxu0
      %v706 = vpop.f32.mrb[0].mxu0
      %v707 = vadd.f32 %v651, %v706
      %v708 = vpop.f32.mrb[0].mxu0
      %709 = vdwg.mxu0
      %v710 = vmax.f32 %v704, 0.0
      %v711 = vmax.f32 %v707, 0.0
      %v712 = vld [vmem:[%s7] sm:$0x1]
      %v714 = vlaneseq
      %v715 = vshrl.u32 %v714, 7
      %v716 = vsub.s32 0, %v715
      %v717 = vrot.slane %v712, %v716
      %v719 = vmul.f32 %v710, %v717
      %v720 = vmul.f32 %v711, %v717
      %v721 = vsel %vm486, %v719, 0.0
      %722 = vadd.xlane.f32.xlu0 %v721
      %v723 = vpop.xlane.xlu0 %722
      %v724 = vsel %vm486, %v720, 0.0
      %725 = vadd.xlane.f32.xlu0 %v724
      %v726 = vpop.xlane.xlu0 %725
      %v727 = vadd.f32 %v519, %v723
      %v728 = vadd.f32 %v520, %v726
      %v729 = vxor.u32 %v727, 2147483648
      %v730 = vxor.u32 %v728, 2147483648
      %v731 = vmul.f32 %v729, 1.442695
      %v732 = vpow.pop %v731
      %v733 = vmul.f32 %v730, 1.442695
      %v734 = vpow.pop %v733
      %v735 = vadd.f32 %v732, 1.0
      %v736 = vadd.f32 %v734, 1.0
      %v737 = vrcp.pop %v735
      %v738 = vmul.f32 1.0, %v737
      %v739 = vrcp.pop %v736
      %v740 = vmul.f32 1.0, %v739
      %743 = vrot.lane.b32.xlu0 %v738, 62
      %v744 = vpop.permute.xlu0 %743
      %745 = vrot.lane.b32.xlu0 %v740, 62
      %v746 = vpop.permute.xlu0 %745
      %vm749 = vcmask 7168
      %750 = vst.msk [vmem:[%s335] sm:$0xff] %vm749, %v744
      %751 = vst.msk [vmem:[%s335 + $0x8] sm:$0xff] %vm749, %v746
      %s752 = smul.u32 2, %s21
      %p753 = scmp.lt.s32.totalorder %s752, 5
      %s754 = scalar_select %p753, %s752, 5
      %s755 = smul.addr %s754, 8
      %s756 = scalar_lea.vmem %s9, %s755
      // Predicated region
      $region57: #{tpu_custom_call.1} parent=55 // pred_check
        %p757 = pneg %p233
      $region58: #{tpu_custom_call.1} parent=55 // pred_check_branch
        %759 = sbr.rel (%p757) target = $region60
      $region59: #{tpu_custom_call.1} parent=55 // pred_region
        %s760 = smul.u32 2, %s21
      $region60: #{tpu_custom_call.1} parent=55 // pred_fallthru
        _
    $region56: #{tpu_custom_call.1} parent=5 // pred_fallthru
      _
    %p761 = scmp.le.s32.totalorder 2, %s16
    // Predicated region
    $region61: #{tpu_custom_call.1} parent=5 // pred_check
      %p762 = pneg %p761
    $region62: #{tpu_custom_call.1} parent=5 // pred_check_branch
      %764 = sbr.rel (%p762) target = $region64
    $region63: #{tpu_custom_call.1} parent=5 // pred_region
      %s765 = ssub.s32 %s16, 2
      // Predicated region
      $region65: #{tpu_custom_call.1} parent=63 // pred_check
        %p766 = pneg %p239
      $region66: #{tpu_custom_call.1} parent=63 // pred_check_branch
        %768 = sbr.rel (%p766) target = $region68
      $region67: #{tpu_custom_call.1} parent=63 // pred_region
        %s769 = smul.u32 2, %s22
        %p770 = scmp.lt.s32.totalorder %s769, 5
        %s771 = scalar_select %p770, %s769, 5
        %s772 = smul.addr %s771, 8
        %s773 = scalar_lea.vmem %s9, %s772
      $region68: #{tpu_custom_call.1} parent=63 // pred_fallthru
        _
    $region64: #{tpu_custom_call.1} parent=5 // pred_fallthru
      _
  $region6: #{tpu_custom_call.1} parent=0 // loop_footer
    %s20 = sadd.s32 1, %s16
  $region7: #{tpu_custom_call.1} parent=0 // loop_footer_branch
    %15 = sbr.rel target = $region3
  $region8: #{tpu_custom_call.1} parent=0 // loop_exit
    _

</llo_original>
